<compile_context>
chip_gen: v5e
topology: v5e:2x2
jax: 0.10.0
libtpu: 0.0.40
codegen_flags: <defaults>
</compile_context>

<pallas_src>
import jax
import jax.numpy as jnp
from jax import lax
from jax.experimental import pallas as pl
from jax.experimental.pallas import tpu as pltpu

BN_EPS = 1e-5


def _pick_spatial_tile(s, c, k, budget_bytes=8 * 1024 * 1024):
    """Spatial (lane) tile: biggest 128-multiple divisor of s within a VMEM budget."""
    per_col = (2 * c + k) * 4 * 2  # two inputs + one output, double-buffered, f32
    cap = max(128, budget_bytes // max(per_col, 1))
    if s <= cap:
        return s
    start = (min(cap, s) // 128) * 128
    for cand in range(start, 127, -128):
        if s % cand == 0:
            return cand
    return s  # no clean divisor: single block over the full spatial extent


def _fr_stats_kernel(x1_ref, x2_ref, w1_ref, w2_ref, stats_ref):
    """Accumulate per-batch, per-channel sum / sum-of-squares of the pre-BN conv.

    x{1,2}_ref: (1, C, TS)  path-1 / path-2 pixel tiles (spatial on lanes)
    w{1,2}_ref: (P, C)      1x1-conv weights (VMEM-resident)
    stats_ref : (1, K, 2)   col 0 = sum, col 1 = sum of squares (resident acc)
    """
    @pl.when(pl.program_id(1) == 0)
    def _init():
        stats_ref[...] = jnp.zeros_like(stats_ref)

    h1 = jnp.dot(w1_ref[...], x1_ref[0], preferred_element_type=jnp.float32)
    h2 = jnp.dot(w2_ref[...], x2_ref[0], preferred_element_type=jnp.float32)
    h = jnp.concatenate([h1, h2], axis=0)                # (K, TS)
    s = jnp.sum(h, axis=1, keepdims=True)                # (K, 1)
    ss = jnp.sum(h * h, axis=1, keepdims=True)           # (K, 1)
    stats_ref[0] = stats_ref[0] + jnp.concatenate([s, ss], axis=1)


def _fr_apply_kernel(x1_ref, x2_ref, w1_ref, w2_ref, scale_ref, bias_ref,
                     out_ref):
    """1x1 conv + (pre-folded) BatchNorm affine, fused channel concat.

    out_ref: (1, K, TS) lane-dense, NCHW-native tile of concat([p1, p2], ch).
    """
    h1 = jnp.dot(w1_ref[...], x1_ref[0], preferred_element_type=jnp.float32)
    h2 = jnp.dot(w2_ref[...], x2_ref[0], preferred_element_type=jnp.float32)
    h = jnp.concatenate([h1, h2], axis=0)                # (K, TS)
    out_ref[0] = (h * scale_ref[...] + bias_ref[...]).astype(out_ref.dtype)


def factorized_reduction(x, params, stride=2):
    """x: (N, C, H, W) float32 NCHW.  Returns NCHW output (matching PyTorch)."""
    n, c, hh, ww = x.shape

    if stride == 1:
        w_full = params["w"].astype(jnp.float32)         # (K, C)
        k = w_full.shape[0]
        p = k // 2
        h_out, w_out = hh, ww
        s_total = h_out * w_out
        xp = x.reshape(n, c, s_total)                    # free reshape, no copy
        x1p, x2p = xp, xp
        w1, w2 = w_full[:p], w_full[p:]
    else:
        assert hh % 2 == 0 and ww % 2 == 0, "stride-2 path requires even H, W"
        # TODO(synk): odd H/W would need zero-masking of path2's far edge row/col.
        w1 = params["w1"].astype(jnp.float32)            # (P, C)
        w2 = params["w2"].astype(jnp.float32)
        p = w1.shape[0]
        k = 2 * p
        h_out, w_out = hh // 2, ww // 2
        s_total = h_out * w_out
        # path1 input: even rows/cols.  path2: shift-by-(1,1)-with-zero-edge then
        # subsample == odd rows/cols (exact for even H, W).  Plain strided
        # slices in NCHW order -- no transpose, no unused data materialized.
        x1p = x[:, :, 0::2, 0::2].reshape(n, c, s_total)
        x2p = x[:, :, 1::2, 1::2].reshape(n, c, s_total)

    ts = _pick_spatial_tile(s_total, c, k)
    grid = (n, s_total // ts)

    x_spec = pl.BlockSpec((1, c, ts), lambda b, j: (b, 0, j))
    w_spec = pl.BlockSpec((p, c), lambda b, j: (0, 0))
    vec_spec = pl.BlockSpec((k, 1), lambda b, j: (0, 0))

    # ---- Pass 1: per-batch BatchNorm statistics (pipelined, accumulated).
    stats = pl.pallas_call(
        _fr_stats_kernel,
        out_shape=jax.ShapeDtypeStruct((n, k, 2), jnp.float32),
        grid=grid,
        in_specs=[x_spec, x_spec, w_spec, w_spec],
        out_specs=pl.BlockSpec((1, k, 2), lambda b, j: (b, 0, 0)),
        compiler_params=pltpu.CompilerParams(
            dimension_semantics=("parallel", "arbitrary")),
    )(x1p, x2p, w1, w2)

    # Tiny host-side fold: global stats + gamma/beta -> per-channel scale/bias.
    tot = jnp.sum(stats, axis=0)                         # (K, 2)
    count = jnp.float32(n * s_total)
    mean = tot[:, 0] / count
    var = jnp.maximum(tot[:, 1] / count - mean * mean, 0.0)
    inv = lax.rsqrt(var + BN_EPS)
    gamma = params["gamma"].astype(jnp.float32)
    beta = params["beta"].astype(jnp.float32)
    scale = (gamma * inv).reshape(k, 1)
    bias = (beta - mean * gamma * inv).reshape(k, 1)

    # ---- Pass 2: conv + normalize + fused channel concat, NCHW-native output.
    out_flat = pl.pallas_call(
        _fr_apply_kernel,
        out_shape=jax.ShapeDtypeStruct((n, k, s_total), jnp.float32),
        grid=grid,
        in_specs=[x_spec, x_spec, w_spec, w_spec, vec_spec, vec_spec],
        out_specs=pl.BlockSpec((1, k, ts), lambda b, j: (b, 0, j)),
        compiler_params=pltpu.CompilerParams(
            dimension_semantics=("parallel", "parallel")),
    )(x1p, x2p, w1, w2, scale, bias)

    return out_flat.reshape(n, k, h_out, w_out)


# ----------------------------- references -----------------------------------
def _bn_ref(out, params):
    mean = out.mean(axis=(0, 2, 3), keepdims=True)
    var = ((out - mean) ** 2).mean(axis=(0, 2, 3), keepdims=True)
    g = params["gamma"].reshape(1, -1, 1, 1)
    b = params["beta"].reshape(1, -1, 1, 1)
    return (out - mean) * lax.rsqrt(var + BN_EPS) * g + b


def _reference_stride2(x, params):
    """Pure-JAX reference of the PyTorch forward (stride=2)."""
    x1 = x[:, :, ::2, ::2]
    x_shift = jnp.pad(x, ((0, 0), (0, 0), (0, 1), (0, 1)))[:, :, 1:, 1:]
    x2 = x_shift[:, :, ::2, ::2]
    p1 = jnp.einsum("nchw,oc->nohw", x1, params["w1"])
    p2 = jnp.einsum("nchw,oc->nohw", x2, params["w2"])
    out = jnp.concatenate([p1, p2], axis=1)
    return _bn_ref(out, params)


def _reference_stride1(x, params):
    out = jnp.einsum("nchw,oc->nohw", x, params["w"])
    return _bn_ref(out, params)


if __name__ == "__main__":
    key = jax.random.PRNGKey(0)
    n, c, h, w = 2, 4, 16, 16
    out_planes = 8

    k_x, k_w1, k_w2, k_w, k_g, k_b = jax.random.split(key, 6)
    x = jax.random.normal(k_x, (n, c, h, w), jnp.float32)
    gamma = 1.0 + 0.1 * jax.random.normal(k_g, (out_planes,), jnp.float32)
    beta = 0.1 * jax.random.normal(k_b, (out_planes,), jnp.float32)

    # Conv2d weights are (O, Cin, 1, 1) in PyTorch -> stored squeezed (O, Cin).
    params2 = {
        "w1": 0.1 * jax.random.normal(k_w1, (out_planes // 2, c), jnp.float32),
        "w2": 0.1 * jax.random.normal(k_w2, (out_planes // 2, c), jnp.float32),
        "gamma": gamma,
        "beta": beta,
    }
    out2 = jax.block_until_ready(factorized_reduction(x, params2, stride=2))
    assert out2.shape == (n, out_planes, h // 2, w // 2), out2.shape
    ref2 = _reference_stride2(x, params2)
    assert jnp.allclose(out2, ref2, rtol=1e-4, atol=1e-4), "stride-2 mismatch"

    params1 = {
        "w": 0.1 * jax.random.normal(k_w, (out_planes, c), jnp.float32),
        "gamma": gamma,
        "beta": beta,
    }
    out1 = jax.block_until_ready(factorized_reduction(x, params1, stride=1))
    assert out1.shape == (n, out_planes, h, w), out1.shape
    ref1 = _reference_stride1(x, params1)
    assert jnp.allclose(out1, ref1, rtol=1e-4, atol=1e-4), "stride-1 mismatch"

    print("KERNEL_OK")
</pallas_src>

<mosaic_0001>
module attributes {stable_mosaic.version = 11 : i64} {
  func.func @_fr_stats_kernel(%arg0: i32, %arg1: i32, %arg2: memref<1x4x64xf32, #tpu.memory_space<vmem>>, %arg3: memref<1x4x64xf32, #tpu.memory_space<vmem>>, %arg4: memref<4x4xf32, #tpu.memory_space<vmem>>, %arg5: memref<4x4xf32, #tpu.memory_space<vmem>>, %arg6: memref<1x8x2xf32, #tpu.memory_space<vmem>>) attributes {dimension_semantics = [#tpu.dimension_semantics<parallel>, #tpu.dimension_semantics<arbitrary>], iteration_bounds = array<i64: 2, 1>, scalar_prefetch = 0 : i64, scratch_operands = 0 : i64, tpu.core_type = #tpu.core_type<tc>, window_params = [{transform_indices = @transform_0, window_bounds = array<i64: 1, 4, 64>}, {transform_indices = @transform_1, window_bounds = array<i64: 1, 4, 64>}, {pipeline_mode = #tpu.pipeline_mode<synchronous>, transform_indices = @transform_2, window_bounds = array<i64: 4, 4>}, {pipeline_mode = #tpu.pipeline_mode<synchronous>, transform_indices = @transform_3, window_bounds = array<i64: 4, 4>}, {transform_indices = @transform_4, window_bounds = array<i64: 1, 8, 2>}]} {
    %c0_i32 = arith.constant 0 : i32
    %0 = arith.cmpi eq, %arg1, %c0_i32 : i32
    %1 = arith.extui %0 : i1 to i32
    %c0_i32_0 = arith.constant 0 : i32
    %2 = arith.cmpi ne, %1, %c0_i32_0 : i32
    scf.if %2 {
      %cst_19 = arith.constant 0.000000e+00 : f32
      %24 = vector.broadcast %cst_19 : f32 to vector<1x8x2xf32>
      %c0_20 = arith.constant 0 : index
      %c0_21 = arith.constant 0 : index
      %c0_22 = arith.constant 0 : index
      %25 = vector.load %arg6[%c0_20, %c0_21, %c0_22] : memref<1x8x2xf32, #tpu.memory_space<vmem>>, vector<1x8x2xf32>
      tpu.vector_store %arg6[%c0_20, %c0_21, %c0_22], %24 {strides = array<i32>} : memref<1x8x2xf32, #tpu.memory_space<vmem>>, vector<1x8x2xf32>,
    } else {
    }
    %c0 = arith.constant 0 : index
    %c0_1 = arith.constant 0 : index
    %3 = vector.load %arg4[%c0, %c0_1] : memref<4x4xf32, #tpu.memory_space<vmem>>, vector<4x4xf32>
    %c0_2 = arith.constant 0 : index
    %c0_3 = arith.constant 0 : index
    %c0_4 = arith.constant 0 : index
    %4 = vector.load %arg2[%c0_2, %c0_3, %c0_4] : memref<1x4x64xf32, #tpu.memory_space<vmem>>, vector<1x4x64xf32>
    %5 = vector.shape_cast %4 : vector<1x4x64xf32> to vector<4x64xf32>
    %cst = arith.constant dense<0.000000e+00> : vector<4x64xf32>
    %6 = tpu.matmul %3, %5, %cst {dimension_numbers = #tpu.dot_dimension_numbers<[1], [0], [0], [1], [0, 0, 1, 1], [], []>} : vector<4x4xf32>, vector<4x64xf32>, vector<4x64xf32> -> vector<4x64xf32>
    %c0_5 = arith.constant 0 : index
    %c0_6 = arith.constant 0 : index
    %7 = vector.load %arg5[%c0_5, %c0_6] : memref<4x4xf32, #tpu.memory_space<vmem>>, vector<4x4xf32>
    %c0_7 = arith.constant 0 : index
    %c0_8 = arith.constant 0 : index
    %c0_9 = arith.constant 0 : index
    %8 = vector.load %arg3[%c0_7, %c0_8, %c0_9] : memref<1x4x64xf32, #tpu.memory_space<vmem>>, vector<1x4x64xf32>
    %9 = vector.shape_cast %8 : vector<1x4x64xf32> to vector<4x64xf32>
    %cst_10 = arith.constant dense<0.000000e+00> : vector<4x64xf32>
    %10 = tpu.matmul %7, %9, %cst_10 {dimension_numbers = #tpu.dot_dimension_numbers<[1], [0], [0], [1], [0, 0, 1, 1], [], []>} : vector<4x4xf32>, vector<4x64xf32>, vector<4x64xf32> -> vector<4x64xf32>
    %11 = tpu.concatenate %6, %10 in 0 : vector<4x64xf32>, vector<4x64xf32> -> vector<8x64xf32>
    %cst_11 = arith.constant dense<0.000000e+00> : vector<8xf32>
    %12 = vector.multi_reduction <add>, %11, %cst_11 [1] : vector<8x64xf32> to vector<8xf32>
    %13 = vector.shape_cast %12 : vector<8xf32> to vector<8x1xf32>
    %14 = arith.mulf %11, %11 : vector<8x64xf32>
    %cst_12 = arith.constant dense<0.000000e+00> : vector<8xf32>
    %15 = vector.multi_reduction <add>, %14, %cst_12 [1] : vector<8x64xf32> to vector<8xf32>
    %16 = vector.shape_cast %15 : vector<8xf32> to vector<8x1xf32>
    %c0_13 = arith.constant 0 : index
    %c0_14 = arith.constant 0 : index
    %c0_15 = arith.constant 0 : index
    %17 = vector.load %arg6[%c0_13, %c0_14, %c0_15] : memref<1x8x2xf32, #tpu.memory_space<vmem>>, vector<1x8x2xf32>
    %18 = vector.shape_cast %17 : vector<1x8x2xf32> to vector<8x2xf32>
    %19 = tpu.concatenate %13, %16 in 1 : vector<8x1xf32>, vector<8x1xf32> -> vector<8x2xf32>
    %20 = arith.addf %18, %19 : vector<8x2xf32>
    %c0_16 = arith.constant 0 : index
    %c0_17 = arith.constant 0 : index
    %c0_18 = arith.constant 0 : index
    %21 = vector.load %arg6[%c0_16, %c0_17, %c0_18] : memref<1x8x2xf32, #tpu.memory_space<vmem>>, vector<1x8x2xf32>
    %22 = vector.shape_cast %21 : vector<1x8x2xf32> to vector<8x2xf32>
    %23 = vector.shape_cast %20 : vector<8x2xf32> to vector<1x8x2xf32>
    tpu.vector_store %arg6[%c0_16, %c0_17, %c0_18], %23 {strides = array<i32>} : memref<1x8x2xf32, #tpu.memory_space<vmem>>, vector<1x8x2xf32>,
    return
  }
  func.func @transform_0(%arg0: i32, %arg1: i32) -> (i32, i32, i32) {
    %c0_i32 = arith.constant 0 : i32
    %c0_i32_0 = arith.constant 0 : i32
    return %arg0, %c0_i32, %arg1 : i32, i32, i32
  }
  func.func @transform_1(%arg0: i32, %arg1: i32) -> (i32, i32, i32) {
    %c0_i32 = arith.constant 0 : i32
    %c0_i32_0 = arith.constant 0 : i32
    return %arg0, %c0_i32, %arg1 : i32, i32, i32
  }
  func.func @transform_2(%arg0: i32, %arg1: i32) -> (i32, i32) {
    %c0_i32 = arith.constant 0 : i32
    %c0_i32_0 = arith.constant 0 : i32
    %c0_i32_1 = arith.constant 0 : i32
    return %c0_i32, %c0_i32_0 : i32, i32
  }
  func.func @transform_3(%arg0: i32, %arg1: i32) -> (i32, i32) {
    %c0_i32 = arith.constant 0 : i32
    %c0_i32_0 = arith.constant 0 : i32
    %c0_i32_1 = arith.constant 0 : i32
    return %c0_i32, %c0_i32_0 : i32, i32
  }
  func.func @transform_4(%arg0: i32, %arg1: i32) -> (i32, i32, i32) {
    %c0_i32 = arith.constant 0 : i32
    %c0_i32_0 = arith.constant 0 : i32
    %c0_i32_1 = arith.constant 0 : i32
    return %arg0, %c0_i32, %c0_i32_0 : i32, i32, i32
  }
}

</mosaic_0001>

<llo_original>
// kernel: tpu_custom_call.1
$region0: #{tpu_custom_call.1}
  #allocation0 [shape = 'u32[]', space=smem, size = 0x4, offset = 0x4, fixed_abs, tag = 'smem constant byte address 0x4 - core index']
  #allocation1 [shape = 'u32[72,128]{1,0:T(1,128)}', space=vmem, size = 0x9000, scoped, tag = 'internal scratch']
  %s0 = inlined_call_operand.hbm [shape: f32[2,4,64], index: 0, kind: input, shape index: {}]
  %s1 = inlined_call_operand.hbm [shape: f32[2,4,64], index: 1, kind: input, shape index: {}]
  %s2 = inlined_call_operand.hbm [shape: f32[4,4], index: 2, kind: input, shape index: {}]
  %s3 = inlined_call_operand.hbm [shape: f32[4,4], index: 3, kind: input, shape index: {}]
  %s4 = inlined_call_operand.vmem [shape: f32[2,8,2], index: 4, kind: output, shape index: {}]
  %s5 = sld [smem:[#allocation0]]
  $region69: #{tpu_custom_call.1} parent=0
    _
  %s7 = ssub.s32 1, %s5
  %s8 = scalar_select 0, %s7, %s5
  $region1: #{tpu_custom_call.1} parent=0
    #allocation2 [shape = 'u8[4096]{0}', space=vmem, size = 0x1000, scoped, tag = 'input window, operand 0']
    #allocation3 [shape = 's32[2]{0}', space=sflag, size = 0x8, scoped, tag = 'scoped memory for tpu_custom_call.1']
    #allocation4 [shape = 'u8[4096]{0}', space=vmem, size = 0x1000, scoped, tag = 'input window, operand 1']
    #allocation5 [shape = 's32[2]{0}', space=sflag, size = 0x8, scoped, tag = 'scoped memory for tpu_custom_call.1']
    #allocation6 [shape = 'u8[2048]{0}', space=vmem, size = 0x800, scoped, tag = 'input window, operand 2, single buffered']
    #allocation7 [shape = 'u8[2048]{0}', space=vmem, size = 0x800, scoped, tag = 'input window, operand 3, single buffered']
    #allocation8 [shape = 's32[1]{0}', space=sflag, size = 0x4, scoped, tag = 'scoped memory for tpu_custom_call.1']
    %9 = vsyncpa [#allocation3], 0
    %s10 = scalar_lea.sflag [#allocation3], 1
    %11 = vsyncpa %s10, 0
    %12 = vsyncpa [#allocation5], 0
    %s13 = scalar_lea.sflag [#allocation5], 1
    %14 = vsyncpa %s13, 0
    %15 = vsyncpa [#allocation8], 0
    loop: start=0, step=1, limit=4
    $region2: #{tpu_custom_call.1} parent=1 // loop_pre_header
      _
    $region3: #{tpu_custom_call.1} parent=1 // loop_header
      %s17 = sphi 0, %s21
      %p18 = scmp.ge.s32.totalorder %s17, 4
      %s24 = sphi 0, %s36
      %s25 = sphi 0, %s32
      %s26 = sphi 0, %s24
      %s27 = sphi 0, %s25
      %s28 = sphi 0, %s26
      %s29 = sphi 0, %s27
      %s41 = sphi 0, %s43
      %s44 = sphi 0, %s41
      %s45 = sphi 0, %s44
      %s61 = sphi 0, %s45
      %s69 = sphi 0, %s71
      %s72 = sphi 0, %s69
      %s73 = sphi 0, %s72
      %s89 = sphi 0, %s73
      %s93 = sphi 0, %s93
      %s95 = sphi 0, %s93
      %s96 = sphi 0, %s95
      %s110 = sphi 0, %s96
      %s114 = sphi 0, %s114
      %s116 = sphi 0, %s114
      %s117 = sphi 0, %s116
      %s131 = sphi 0, %s117
      %s137 = sphi 0, %s139
      %s140 = sphi 0, %s137
      %s141 = sphi 0, %s140
      %s157 = sphi 0, %s141
    $region4: #{tpu_custom_call.1} parent=1 // loop_header_branch
      %20 = sbr.rel (%p18) target = $region8
    $region5: #{tpu_custom_call.1} parent=1 // loop_body
      %s22 = ssub.s32 %s17, 1
      %s23 = ssub.s32 %s17, 2
      %s30 = sadd.s32 1, %s25
      %p31 = scmp.ge.s32.totalorder %s30, 1
      %s32 = scalar_select %p31, 0, %s30
      %s33 = sadd.s32 1, %s24
      %s34 = scalar_select %p31, %s33, %s24
      %p35 = scmp.ge.s32.totalorder %s34, 2
      %s36 = scalar_select %p35, 0, %s34
      %s37 = ssub.s32 %s24, %s36
      %s38 = ssub.s32 %s25, %s32
      %s39 = sor.u32 %s37, %s38
      %p40 = scmp.eq.s32.totalorder %s39, 0
      %s42 = sadd.s32 %s41, 1
      %s43 = scalar_select %p40, %s41, %s42
      %p46 = pneg %p40
      %p47 = scmp.eq.s32.totalorder %s17, 1
      %p48 = por %p46, %p47
      %p49 = scmp.ne.s32.totalorder %s41, %s44
      %p50 = scmp.eq.s32.totalorder %s17, 0
      %p51 = por %p49, %p50
      %p52 = scmp.ne.s32.totalorder %s41, %s44
      %p53 = scmp.eq.s32.totalorder %s22, 1
      %p54 = por %p52, %p53
      %p55 = scmp.ne.s32.totalorder %s44, %s45
      %p56 = scmp.eq.s32.totalorder %s22, 0
      %p57 = por %p55, %p56
      %p58 = scmp.ne.s32.totalorder %s44, %s45
      %p59 = scmp.eq.s32.totalorder %s23, 1
      %p60 = por %p58, %p59
      %p62 = scmp.ne.s32.totalorder %s45, %s61
      %p63 = scmp.eq.s32.totalorder %s23, 0
      %p64 = por %p62, %p63
      %s65 = ssub.s32 %s24, %s36
      %s66 = ssub.s32 %s25, %s32
      %s67 = sor.u32 %s65, %s66
      %p68 = scmp.eq.s32.totalorder %s67, 0
      %s70 = sadd.s32 %s69, 1
      %s71 = scalar_select %p68, %s69, %s70
      %p74 = pneg %p68
      %p75 = scmp.eq.s32.totalorder %s17, 1
      %p76 = por %p74, %p75
      %p77 = scmp.ne.s32.totalorder %s69, %s72
      %p78 = scmp.eq.s32.totalorder %s17, 0
      %p79 = por %p77, %p78
      %p80 = scmp.ne.s32.totalorder %s69, %s72
      %p81 = scmp.eq.s32.totalorder %s22, 1
      %p82 = por %p80, %p81
      %p83 = scmp.ne.s32.totalorder %s72, %s73
      %p84 = scmp.eq.s32.totalorder %s22, 0
      %p85 = por %p83, %p84
      %p86 = scmp.ne.s32.totalorder %s72, %s73
      %p87 = scmp.eq.s32.totalorder %s23, 1
      %p88 = por %p86, %p87
      %p90 = scmp.ne.s32.totalorder %s73, %s89
      %p91 = scmp.eq.s32.totalorder %s23, 0
      %p92 = por %p90, %p91
      %s94 = sadd.s32 %s93, 1
      %p97 = scmp.eq.s32.totalorder %s17, 1
      %p98 = scmp.ne.s32.totalorder %s93, %s95
      %p99 = scmp.eq.s32.totalorder %s17, 0
      %p100 = por %p98, %p99
      %p101 = scmp.ne.s32.totalorder %s93, %s95
      %p102 = scmp.eq.s32.totalorder %s22, 1
      %p103 = por %p101, %p102
      %p104 = scmp.ne.s32.totalorder %s95, %s96
      %p105 = scmp.eq.s32.totalorder %s22, 0
      %p106 = por %p104, %p105
      %p107 = scmp.ne.s32.totalorder %s95, %s96
      %p108 = scmp.eq.s32.totalorder %s23, 1
      %p109 = por %p107, %p108
      %p111 = scmp.ne.s32.totalorder %s96, %s110
      %p112 = scmp.eq.s32.totalorder %s23, 0
      %p113 = por %p111, %p112
      %s115 = sadd.s32 %s114, 1
      %p118 = scmp.eq.s32.totalorder %s17, 1
      %p119 = scmp.ne.s32.totalorder %s114, %s116
      %p120 = scmp.eq.s32.totalorder %s17, 0
      %p121 = por %p119, %p120
      %p122 = scmp.ne.s32.totalorder %s114, %s116
      %p123 = scmp.eq.s32.totalorder %s22, 1
      %p124 = por %p122, %p123
      %p125 = scmp.ne.s32.totalorder %s116, %s117
      %p126 = scmp.eq.s32.totalorder %s22, 0
      %p127 = por %p125, %p126
      %p128 = scmp.ne.s32.totalorder %s116, %s117
      %p129 = scmp.eq.s32.totalorder %s23, 1
      %p130 = por %p128, %p129
      %p132 = scmp.ne.s32.totalorder %s117, %s131
      %p133 = scmp.eq.s32.totalorder %s23, 0
      %p134 = por %p132, %p133
      %s135 = ssub.s32 %s24, %s36
      %p136 = scmp.eq.s32.totalorder %s135, 0
      %s138 = sadd.s32 %s137, 1
      %s139 = scalar_select %p136, %s137, %s138
      %p142 = pneg %p136
      %p143 = scmp.eq.s32.totalorder %s17, 1
      %p144 = por %p142, %p143
      %p145 = scmp.ne.s32.totalorder %s137, %s140
      %p146 = scmp.eq.s32.totalorder %s17, 0
      %p147 = por %p145, %p146
      %p148 = scmp.ne.s32.totalorder %s137, %s140
      %p149 = scmp.eq.s32.totalorder %s22, 1
      %p150 = por %p148, %p149
      %p151 = scmp.ne.s32.totalorder %s140, %s141
      %p152 = scmp.eq.s32.totalorder %s22, 0
      %p153 = por %p151, %p152
      %p154 = scmp.ne.s32.totalorder %s140, %s141
      %p155 = scmp.eq.s32.totalorder %s23, 1
      %p156 = por %p154, %p155
      %p158 = scmp.ne.s32.totalorder %s141, %s157
      %p159 = scmp.eq.s32.totalorder %s23, 0
      %p160 = por %p158, %p159
      %p161 = scmp.le.s32.totalorder 1, %s17
      %p162 = scmp.lt.s32.totalorder %s17, 3
      %p163 = pnand %p161, %p162
      %p164 = pneg %p163
      // Predicated region
      $region9: #{tpu_custom_call.1} parent=5 // pred_check
        _
      $region10: #{tpu_custom_call.1} parent=5 // pred_check_branch
        %166 = sbr.rel (%p163) target = $region12
      $region11: #{tpu_custom_call.1} parent=5 // pred_region
        %s167 = ssub.s32 %s17, 1
        // Predicated region
        $region13: #{tpu_custom_call.1} parent=11 // pred_check
          %p168 = pneg %p106
        $region14: #{tpu_custom_call.1} parent=11 // pred_check_branch
          %170 = sbr.rel (%p168) target = $region16
        $region15: #{tpu_custom_call.1} parent=11 // pred_region
          %172 = vsyncadd [#allocation5], 0
          %s174 = sshll.u32 %s2, 4
          %s175 = int_to_ptr.hbm [resolvable:$true] %s174
          %s176 = sshll.u32 [#allocation6], 4
          %s177 = int_to_ptr.vmem [resolvable:$true] %s176
          %179 = dma.hbm_to_vmem [thread:$0]  %s175, 64, %s177, [#allocation5]
        $region16: #{tpu_custom_call.1} parent=11 // pred_fallthru
          _
        // Predicated region
        $region17: #{tpu_custom_call.1} parent=11 // pred_check
          %p180 = pneg %p127
        $region18: #{tpu_custom_call.1} parent=11 // pred_check_branch
          %182 = sbr.rel (%p180) target = $region20
        $region19: #{tpu_custom_call.1} parent=11 // pred_region
          %184 = vsyncadd [#allocation8], 0
          %s186 = sshll.u32 %s3, 4
          %s187 = int_to_ptr.hbm [resolvable:$true] %s186
          %s188 = sshll.u32 [#allocation7], 4
          %s189 = int_to_ptr.vmem [resolvable:$true] %s188
          %191 = dma.hbm_to_vmem [thread:$0]  %s187, 64, %s189, [#allocation8]
        $region20: #{tpu_custom_call.1} parent=11 // pred_fallthru
          _
      $region12: #{tpu_custom_call.1} parent=5 // pred_fallthru
        _
      %p192 = scmp.lt.s32.totalorder %s17, 2
      // Predicated region
      $region21: #{tpu_custom_call.1} parent=5 // pred_check
        %p193 = pneg %p192
      $region22: #{tpu_custom_call.1} parent=5 // pred_check_branch
        %195 = sbr.rel (%p193) target = $region24
      $region23: #{tpu_custom_call.1} parent=5 // pred_region
        // Predicated region
        $region25: #{tpu_custom_call.1} parent=23 // pred_check
          %p196 = pneg %p51
        $region26: #{tpu_custom_call.1} parent=23 // pred_check_branch
          %198 = sbr.rel (%p196) target = $region28
        $region27: #{tpu_custom_call.1} parent=23 // pred_region
          %s199 = sand.u32 %s41, 1
          %s200 = scalar_lea.sflag [#allocation3], %s199
          %s201 = sand.u32 %s41, 1
          %s202 = smul.addr %s201, 4
          %s203 = scalar_lea.vmem [#allocation2], %s202
          %205 = vsyncadd %s200, 0
          %s206 = sadd.s32 %s25, %s24
          %s207 = smul.addr %s206, 4
          %s208 = scalar_lea.hbm %s0, %s207
          %s210 = sshll.u32 %s208, 4
          %s211 = int_to_ptr.hbm [resolvable:$true] %s210
          %s212 = sshll.u32 %s203, 4
          %s213 = int_to_ptr.vmem [resolvable:$true] %s212
          %215 = dma.hbm_to_vmem [thread:$0]  %s211, 64, %s213, %s200
        $region28: #{tpu_custom_call.1} parent=23 // pred_fallthru
          _
        // Predicated region
        $region29: #{tpu_custom_call.1} parent=23 // pred_check
          %p216 = pneg %p79
        $region30: #{tpu_custom_call.1} parent=23 // pred_check_branch
          %218 = sbr.rel (%p216) target = $region32
        $region31: #{tpu_custom_call.1} parent=23 // pred_region
          %s219 = sand.u32 %s17, 1
          %s220 = scalar_lea.sflag [#allocation5], %s219
          %s221 = sand.u32 %s69, 1
          %s222 = smul.addr %s221, 4
          %s223 = scalar_lea.vmem [#allocation4], %s222
          %225 = vsyncadd %s220, 0
          %s226 = sadd.s32 %s25, %s24
          %s227 = smul.addr %s226, 4
          %s228 = scalar_lea.hbm %s1, %s227
          %s230 = sshll.u32 %s228, 4
          %s231 = int_to_ptr.hbm [resolvable:$true] %s230
          %s232 = sshll.u32 %s223, 4
          %s233 = int_to_ptr.vmem [resolvable:$true] %s232
          %235 = dma.hbm_to_vmem [thread:$0]  %s231, 64, %s233, %s220
        $region32: #{tpu_custom_call.1} parent=23 // pred_fallthru
          _
      $region24: #{tpu_custom_call.1} parent=5 // pred_fallthru
        _
      %p236 = scmp.le.s32.totalorder 1, %s17
      %p237 = scmp.lt.s32.totalorder %s17, 3
      %p238 = pnand %p236, %p237
      %p239 = pneg %p238
      // Predicated region
      $region33: #{tpu_custom_call.1} parent=5 // pred_check
        _
      $region34: #{tpu_custom_call.1} parent=5 // pred_check_branch
        %241 = sbr.rel (%p238) target = $region36
      $region35: #{tpu_custom_call.1} parent=5 // pred_region
        %s242 = ssub.s32 %s17, 1
        %s243 = sand.u32 %s44, 1
        %s244 = scalar_lea.sflag [#allocation3], %s243
        %s245 = sand.u32 %s44, 1
        %s246 = smul.addr %s245, 4
        %s247 = scalar_lea.vmem [#allocation2], %s246
        // Predicated region
        $region37: #{tpu_custom_call.1} parent=35 // pred_check
          %p248 = pneg %p57
        $region38: #{tpu_custom_call.1} parent=35 // pred_check_branch
          %250 = sbr.rel (%p248) target = $region40
        $region39: #{tpu_custom_call.1} parent=35 // pred_region
          %252 = dma.done %s244, 64
        $region40: #{tpu_custom_call.1} parent=35 // pred_fallthru
          _
        %s253 = sand.u32 %s22, 1
        %s254 = scalar_lea.sflag [#allocation5], %s253
        %s255 = sand.u32 %s72, 1
        %s256 = smul.addr %s255, 4
        %s257 = scalar_lea.vmem [#allocation4], %s256
        // Predicated region
        $region41: #{tpu_custom_call.1} parent=35 // pred_check
          %p258 = pneg %p85
        $region42: #{tpu_custom_call.1} parent=35 // pred_check_branch
          %260 = sbr.rel (%p258) target = $region44
        $region43: #{tpu_custom_call.1} parent=35 // pred_region
          %262 = dma.done %s254, 64
        $region44: #{tpu_custom_call.1} parent=35 // pred_fallthru
          _
        // Predicated region
        $region45: #{tpu_custom_call.1} parent=35 // pred_check
          %p263 = pneg %p106
        $region46: #{tpu_custom_call.1} parent=35 // pred_check_branch
          %265 = sbr.rel (%p263) target = $region48
        $region47: #{tpu_custom_call.1} parent=35 // pred_region
          %267 = dma.done [#allocation5], 64
        $region48: #{tpu_custom_call.1} parent=35 // pred_fallthru
          _
        // Predicated region
        $region49: #{tpu_custom_call.1} parent=35 // pred_check
          %p268 = pneg %p127
        $region50: #{tpu_custom_call.1} parent=35 // pred_check_branch
          %270 = sbr.rel (%p268) target = $region52
        $region51: #{tpu_custom_call.1} parent=35 // pred_region
          %272 = dma.done [#allocation8], 64
        $region52: #{tpu_custom_call.1} parent=35 // pred_fallthru
          _
        %s273 = sand.u32 %s44, 1
        %s274 = scalar_lea.sflag [#allocation3], %s273
        %s275 = sand.u32 %s44, 1
        %s276 = smul.addr %s275, 4
        %s277 = scalar_lea.vmem [#allocation2], %s276
        %p278 = pneg %p57
        %p279 = pneg %p54
        %s280 = sand.u32 %s22, 1
        %s281 = scalar_lea.sflag [#allocation5], %s280
        %s282 = sand.u32 %s72, 1
        %s283 = smul.addr %s282, 4
        %s284 = scalar_lea.vmem [#allocation4], %s283
        %p285 = pneg %p85
        %p286 = pneg %p82
        %p287 = pneg %p106
        %p288 = pneg %p103
        %p289 = pneg %p127
        %p290 = pneg %p124
        %p291 = pneg %p153
        %p292 = pneg %p150
        %p293 = scmp.lt.s32.totalorder %s26, 1
        %s294 = scalar_select %p293, %s26, 1
        %s295 = smul.addr %s294, 8
        %s296 = scalar_lea.vmem %s4, %s295
        %p297 = scmp.lt.s32.totalorder %s26, 1
        %s298 = scalar_select %p297, %s26, 1
        %s299 = smul.addr %s298, 8
        %s300 = scalar_lea.vmem %s4, %s299
        %p301 = scmp.eq.s32.totalorder %s27, 0
        // Predicated region
        $region53: #{tpu_custom_call.1} parent=35 // pred_check
          %p302 = pneg %p301
        $region54: #{tpu_custom_call.1} parent=35 // pred_check_branch
          %304 = sbr.rel (%p302) target = $region56
        $region55: #{tpu_custom_call.1} parent=35 // pred_region
          %vm305 = vcmask 15360
          %306 = vst.msk [vmem:[%s300] sm:$0xff] %vm305, 0.0
        $region56: #{tpu_custom_call.1} parent=35 // pred_fallthru
          _
        %v307 = vld [vmem:[#allocation6] sm:$0xf]
        %v308 = vld [vmem:[%s247] sm:$0xf]
        %vm309 = vcmask 31744
        %v311 = vsel %vm309, %v307, 0
        %vm313 = vcmask 1043456
        %v315 = vsel %vm313, %v308, 0
        %317 = vmatpush.msra.mxu0 0.0
        %318 = vmatpush.msra.mxu0 0.0
        %319 = vmatpush.msra.mxu0 0.0
        %320 = vmatpush.msra.mxu0 0.0
        %321 = vmatpush.msra.mxu0 0.0
        %322 = vmatpush.msra.mxu0 0.0
        %323 = vmatpush.msra.mxu0 0.0
        %324 = vmatpush.msra.mxu0 0.0
        %325 = vmatpush.msra.mxu0 0.0
        %326 = vmatpush.msra.mxu0 0.0
        %327 = vmatpush.msra.mxu0 0.0
        %328 = vmatpush.msra.mxu0 0.0
        %329 = vmatpush.msra.mxu0 0.0
        %330 = vmatpush.msra.mxu0 0.0
        %331 = vmatpush.msra.mxu0 0.0
        %332 = vmatpush.msra.mxu0 %v315
        %333 = vmatmul.f32.gmra.mxu0 %v311
        %v334 = vpop.f32.mrf.mxu0
        %v335 = vadd.f32 0.0, %v334
        %336 = vdwg.mxu0
        %v337 = vld [vmem:[#allocation7] sm:$0xf]
        %v338 = vld [vmem:[%s257] sm:$0xf]
        %v340 = vsel %vm309, %v337, 0
        %v343 = vsel %vm313, %v338, 0
        %345 = vmatpush.msra.mxu0 0.0
        %346 = vmatpush.msra.mxu0 0.0
        %347 = vmatpush.msra.mxu0 0.0
        %348 = vmatpush.msra.mxu0 0.0
        %349 = vmatpush.msra.mxu0 0.0
        %350 = vmatpush.msra.mxu0 0.0
        %351 = vmatpush.msra.mxu0 0.0
        %352 = vmatpush.msra.mxu0 0.0
        %353 = vmatpush.msra.mxu0 0.0
        %354 = vmatpush.msra.mxu0 0.0
        %355 = vmatpush.msra.mxu0 0.0
        %356 = vmatpush.msra.mxu0 0.0
        %357 = vmatpush.msra.mxu0 0.0
        %358 = vmatpush.msra.mxu0 0.0
        %359 = vmatpush.msra.mxu0 0.0
        %360 = vmatpush.msra.mxu0 %v343
        %361 = vmatmul.f32.gmra.mxu0 %v340
        %v362 = vpop.f32.mrf.mxu0
        %v363 = vadd.f32 0.0, %v362
        %364 = vdwg.mxu0
        %v366 = vrot.slane %v363, 4
        %v368 = vsel %vm313, %v335, %v366
        %vm369 = vcmask 523264
        %v370 = vsel %vm369, %v368, 0.0
        %371 = vadd.xlane.f32.xlu0 %v370
        %v372 = vpop.xlane.xlu0 %371
        %v373 = vmul.f32 %v368, %v368
        %v374 = vsel %vm369, %v373, 0.0
        %375 = vadd.xlane.f32.xlu0 %v374
        %v376 = vpop.xlane.xlu0 %375
        %v377 = vld [vmem:[%s300] sm:$0xff]
        %vm378 = vcmask 7168
        %v379 = vsel %vm378, %v372, %v376
        %v380 = vadd.f32 %v377, %v379
        %vm381 = vcmask 15360
        %382 = vst.msk [vmem:[%s300] sm:$0xff] %vm381, %v380
        %p383 = scmp.lt.s32.totalorder %s26, 1
        %s384 = scalar_select %p383, %s26, 1
        %s385 = smul.addr %s384, 8
        %s386 = scalar_lea.vmem %s4, %s385
        // Predicated region
        $region57: #{tpu_custom_call.1} parent=35 // pred_check
          %p387 = pneg %p150
        $region58: #{tpu_custom_call.1} parent=35 // pred_check_branch
          %389 = sbr.rel (%p387) target = $region60
        $region59: #{tpu_custom_call.1} parent=35 // pred_region
          _
        $region60: #{tpu_custom_call.1} parent=35 // pred_fallthru
          _
      $region36: #{tpu_custom_call.1} parent=5 // pred_fallthru
        _
      %p390 = scmp.le.s32.totalorder 2, %s17
      // Predicated region
      $region61: #{tpu_custom_call.1} parent=5 // pred_check
        %p391 = pneg %p390
      $region62: #{tpu_custom_call.1} parent=5 // pred_check_branch
        %393 = sbr.rel (%p391) target = $region64
      $region63: #{tpu_custom_call.1} parent=5 // pred_region
        %s394 = ssub.s32 %s17, 2
        // Predicated region
        $region65: #{tpu_custom_call.1} parent=63 // pred_check
          %p395 = pneg %p156
        $region66: #{tpu_custom_call.1} parent=63 // pred_check_branch
          %397 = sbr.rel (%p395) target = $region68
        $region67: #{tpu_custom_call.1} parent=63 // pred_region
          %p398 = scmp.lt.s32.totalorder %s28, 1
          %s399 = scalar_select %p398, %s28, 1
          %s400 = smul.addr %s399, 8
          %s401 = scalar_lea.vmem %s4, %s400
        $region68: #{tpu_custom_call.1} parent=63 // pred_fallthru
          _
      $region64: #{tpu_custom_call.1} parent=5 // pred_fallthru
        _
    $region6: #{tpu_custom_call.1} parent=1 // loop_footer
      %s21 = sadd.s32 1, %s17
    $region7: #{tpu_custom_call.1} parent=1 // loop_footer_branch
      %16 = sbr.rel target = $region3
    $region8: #{tpu_custom_call.1} parent=1 // loop_exit
      _
    %402 = vsyncpa [#allocation3], 1
    %s403 = scalar_lea.sflag [#allocation3], 1
    %404 = vsyncpa %s403, 1
    %405 = vsyncpa [#allocation5], 1
    %s406 = scalar_lea.sflag [#allocation5], 1
    %407 = vsyncpa %s406, 1
    %408 = vsyncpa [#allocation8], 1

</llo_original>
